<compile_context>
chip_gen: v6e
topology: v6e:2x2x1
jax: 0.10.0
libtpu: 0.0.40
codegen_flags: <defaults>
</compile_context>

<pallas_src>
import math
import functools

import jax
import jax.numpy as jnp
from jax.experimental import pallas as pl
from jax.experimental.pallas import tpu as pltpu


def _rup8(x):
    return ((x + 7) // 8) * 8


# ----------------------------- Pallas kernel --------------------------------
def _critic_kernel(x_ref, w_ref, out_ref, *, off, num_groups, num_phases,
                   neuron, state_cols, onehot_cols):
    f32 = jnp.float32
    B = x_ref.shape[0]
    G, P = num_groups, num_phases
    k_in = state_cols + onehot_cols
    width = 2 * neuron

    def wblk(name, rows):                         # static slice -> zero-cost view
        o = off[name]
        return w_ref[o:o + rows, :]

    def bias(name):                               # pre-replicated to B sublanes
        o = off[name]
        return w_ref[o:o + B, :]

    x_in = x_ref[...]                             # (B, state_cols + G)
    state16 = x_in[:, 0:state_cols]               # zero-padded state, aligned K
    act_f = x_in[:, state_cols:state_cols + G]    # action indices as exact f32

    # One-hot over the G*P fused-table rows (pad columns stay 0; the padded
    # table rows are zero anyway).  G compares + adds, no serial select chain.
    # NOTE: out-of-range actions yield an all-zero one-hot (bias-only result),
    # matching "contributes nothing"; reference jnp.take semantics differ.
    col = jax.lax.broadcasted_iota(jnp.int32, (B, onehot_cols), 1)
    onehot = jnp.zeros((B, onehot_cols), f32)
    for g in range(G):
        in_g = (col >= g * P) & (col < (g + 1) * P)
        match = act_f[:, g:g + 1] == (col - g * P).astype(f32)
        onehot = onehot + jnp.where(in_g & match, 1.0, 0.0)

    u = jnp.concatenate([state16, onehot], axis=-1)          # (B, k_in)

    # 4 MXU pushes total.
    h = jnp.maximum(
        jnp.dot(u, wblk("win", k_in), preferred_element_type=f32) + bias("bin"), 0.0)
    h = jnp.maximum(
        jnp.dot(h, wblk("wd2", width), preferred_element_type=f32) + bias("bd2"), 0.0)
    h = jnp.maximum(
        jnp.dot(h, wblk("wd3", width), preferred_element_type=f32) + bias("bd3"), 0.0)
    xm = jnp.maximum(
        jnp.dot(h, wblk("wm", width), preferred_element_type=f32) + bias("bm"), 0.0)

    # fc_out: VPU multiply + lane reduction (N=1 column is a waste of an MXU push).
    wo_row = w_ref[off["wo"]:off["wo"] + 1, :]                # (1, width)
    bo_col = w_ref[off["bo"]:off["bo"] + B, 0:1]              # (B, 1)
    out_ref[...] = jnp.sum(xm * wo_row, axis=-1, keepdims=True) + bo_col


# --------------------------- parameter packing --------------------------------
def pack_params(p, batch):
    """Pack all weights/biases into ONE contiguous (rows, 2*neuron) f32 buffer.
    Towers are fused into block-diagonal 64-wide weights; embedding@fc_action1
    is pre-fused into a one-hot table; biases are pre-replicated to `batch`
    sublanes. Every block starts on an 8-row (sublane) boundary."""
    f32 = jnp.float32
    neuron = p["w1"].shape[1]
    state_dim = p["w1"].shape[0]
    num_phases, emb = p["embed"].shape
    num_groups = p["wa1"].shape[0] // emb
    width = 2 * neuron
    state_cols = _rup8(state_dim)                 # 12 -> 16 (aligned K for fc1)
    gp = num_groups * num_phases
    onehot_cols = _rup8(gp)                       # 20 -> 24

    def Z(r, c):
        return jnp.zeros((r, c), f32)

    # Fused table: T[g*P + ph, :] = embed[ph, :] @ Wa1[g*emb:(g+1)*emb, :]
    wa1_g = jnp.asarray(p["wa1"], f32).reshape(num_groups, emb, neuron)
    table = jnp.einsum("pe,gen->gpn", jnp.asarray(p["embed"], f32),
                       wa1_g).reshape(gp, neuron)

    w1p = Z(state_cols, neuron).at[:state_dim].set(jnp.asarray(p["w1"], f32))
    tpad = Z(onehot_cols, neuron).at[:gp].set(table)

    # Stage 1: [xs1 | xa1] = relu([state16 | onehot24] @ Win + [b1 | ba1])
    win = jnp.concatenate([
        jnp.concatenate([w1p, Z(state_cols, neuron)], axis=1),
        jnp.concatenate([Z(onehot_cols, neuron), tpad], axis=1)], axis=0)

    eye = jnp.eye(neuron, dtype=f32)
    # Stage 2: state half fc2, action half identity pass-through (exact: xa1 >= 0)
    wd2 = jnp.concatenate([
        jnp.concatenate([jnp.asarray(p["w2"], f32), Z(neuron, neuron)], axis=1),
        jnp.concatenate([Z(neuron, neuron), eye], axis=1)], axis=0)
    # Stage 3: blkdiag(fc3, fc_action2)
    wd3 = jnp.concatenate([
        jnp.concatenate([jnp.asarray(p["w3"], f32), Z(neuron, neuron)], axis=1),
        jnp.concatenate([Z(neuron, neuron), jnp.asarray(p["wa2"], f32)], axis=1)],
        axis=0)
    # Stage 4: original (unsplit) fc_merge weight; right half zero.
    wm64 = jnp.concatenate([jnp.asarray(p["wm"], f32), Z(width, neuron)], axis=1)
    wo_row = jnp.concatenate([jnp.asarray(p["wo"], f32).T, Z(1, neuron)], axis=1)

    brep = _rup8(batch)

    def bias_row(left, right):
        row = jnp.concatenate([jnp.asarray(left, f32).reshape(1, neuron),
                               jnp.asarray(right, f32).reshape(1, neuron)], axis=1)
        return jnp.broadcast_to(row, (brep, width))

    zb = jnp.zeros((1, neuron), f32)
    blocks = [
        ("win", win), ("wd2", wd2), ("wd3", wd3), ("wm", wm64), ("wo", wo_row),
        ("bin", bias_row(p["b1"], p["ba1"])),
        ("bd2", bias_row(p["b2"], zb)),
        ("bd3", bias_row(p["b3"], p["ba2"])),
        ("bm", bias_row(p["bm"], zb)),
        ("bo", jnp.broadcast_to(jnp.asarray(p["bo"], f32).reshape(1, 1),
                                (brep, width))),
    ]

    off, rows, cur = {}, [], 0
    for name, arr in blocks:
        arr = jnp.asarray(arr, f32)
        off[name] = cur
        padded = _rup8(arr.shape[0])
        if padded != arr.shape[0]:
            arr = jnp.pad(arr, ((0, padded - arr.shape[0]), (0, 0)))
        rows.append(arr)
        cur += padded
    packed = jnp.concatenate(rows, axis=0)

    meta = dict(off=off, neuron=neuron, width=width, state_cols=state_cols,
                onehot_cols=onehot_cols, num_groups=num_groups,
                num_phases=num_phases, batch=batch, state_dim=state_dim)
    return packed, meta


def make_critic_forward(meta):
    kernel = functools.partial(
        _critic_kernel, off=meta["off"], num_groups=meta["num_groups"],
        num_phases=meta["num_phases"], neuron=meta["neuron"],
        state_cols=meta["state_cols"], onehot_cols=meta["onehot_cols"])
    vmem = pltpu.MemorySpace.VMEM
    B = meta["batch"]
    state_dim = meta["state_dim"]
    state_cols = meta["state_cols"]

    @jax.jit
    def forward(state, action, packed):
        # state: (B, state_dim) f32, action: (B, G) int -> (B, 1) f32.
        # Single combined input operand: [state zero-padded to 16 | action as
        # exact small floats] -> 2 input DMAs total (combined input + params).
        xs = jnp.pad(state.astype(jnp.float32),
                     ((0, 0), (0, state_cols - state_dim)))
        x_in = jnp.concatenate([xs, action.astype(jnp.float32)], axis=-1)
        return pl.pallas_call(
            kernel,
            out_shape=jax.ShapeDtypeStruct((B, 1), jnp.float32),
            in_specs=[pl.BlockSpec(memory_space=vmem)] * 2,
            out_specs=pl.BlockSpec(memory_space=vmem),
        )(x_in, packed)

    return forward


# --------------------------- parameter construction --------------------------
def init_params(key, state_dim, num_groups, num_phases, neuron):
    """Deterministic init matching the PyTorch module's parameter shapes.
    Linear weights stored transposed as (in, out); biases as (1, out)."""
    ks = jax.random.split(key, 16)

    def linear(k, fan_in, fan_out):
        bound = 1.0 / math.sqrt(fan_in)
        kw, kb = jax.random.split(k)
        w = jax.random.uniform(kw, (fan_in, fan_out), jnp.float32, -bound, bound)
        b = jax.random.uniform(kb, (1, fan_out), jnp.float32, -bound, bound)
        return w, b

    p = {}
    p["embed"] = jax.random.normal(ks[0], (num_phases, 16), jnp.float32)
    p["w1"], p["b1"] = linear(ks[1], state_dim, neuron)
    p["w2"], p["b2"] = linear(ks[2], neuron, neuron)
    p["w3"], p["b3"] = linear(ks[3], neuron, neuron)
    p["wa1"], p["ba1"] = linear(ks[4], num_groups * 16, neuron)
    p["wa2"], p["ba2"] = linear(ks[5], neuron, neuron)
    p["wm"], p["bm"] = linear(ks[6], 2 * neuron, neuron)
    p["wo"], p["bo"] = linear(ks[7], neuron, 1)
    return p


# --------------------------------- reference ---------------------------------
def critic_reference(state, action, p):
    relu = jax.nn.relu
    xs = relu(state @ p["w1"] + p["b1"])
    xs = relu(xs @ p["w2"] + p["b2"])
    xs = relu(xs @ p["w3"] + p["b3"])
    xa = jnp.take(p["embed"], action, axis=0).reshape(state.shape[0], -1)
    xa = relu(xa @ p["wa1"] + p["ba1"])
    xa = relu(xa @ p["wa2"] + p["ba2"])
    x = jnp.concatenate([xs, xa], axis=-1)
    x = relu(x @ p["wm"] + p["bm"])
    return x @ p["wo"] + p["bo"]


# ------------------------------------ main ------------------------------------
if __name__ == "__main__":
    batch = 8
    state_dim = 12
    num_groups = 4
    num_phases = 5
    neuron = 32

    key = jax.random.PRNGKey(0)
    k_param, k_state, k_action = jax.random.split(key, 3)

    params = init_params(k_param, state_dim, num_groups, num_phases, neuron)
    state = jax.random.normal(k_state, (batch, state_dim), jnp.float32)
    action = jax.random.randint(k_action, (batch, num_groups), 0, num_phases,
                                dtype=jnp.int32)

    packed, meta = pack_params(params, batch)        # one-time packing
    packed = jax.block_until_ready(packed)
    critic_forward = make_critic_forward(meta)

    out = critic_forward(state, action, packed)
    out = jax.block_until_ready(out)

    ref = critic_reference(state, action, params)
    assert out.shape == (batch, 1)
    assert jnp.allclose(out, ref, atol=1e-4, rtol=1e-4), (out, ref)

    print("KERNEL_OK")
</pallas_src>

<mosaic_0001>
module attributes {stable_mosaic.version = 11 : i64} {
  func.func @_critic_kernel(%arg0: memref<8x20xf32, #tpu.memory_space<vmem>>, %arg1: memref<280x64xf32, #tpu.memory_space<vmem>>, %arg2: memref<8x1xf32, #tpu.memory_space<vmem>>) attributes {dimension_semantics = [], scalar_prefetch = 0 : i64, scratch_operands = 0 : i64, tpu.core_type = #tpu.core_type<tc>} {
    %c0 = arith.constant 0 : index
    %c0_0 = arith.constant 0 : index
    %0 = vector.load %arg0[%c0, %c0_0] : memref<8x20xf32, #tpu.memory_space<vmem>>, vector<8x20xf32>
    %1 = vector.extract_strided_slice %0 {offsets = [0, 0], sizes = [8, 16], strides = [1, 1]} : vector<8x20xf32> to vector<8x16xf32>
    %2 = vector.extract_strided_slice %0 {offsets = [0, 16], sizes = [8, 4], strides = [1, 1]} : vector<8x20xf32> to vector<8x4xf32>
    %3 = tpu.iota {dimensions = array<i32: 1>} : vector<8x24xi32>
    %cst = arith.constant 0.000000e+00 : f32
    %4 = vector.broadcast %cst : f32 to vector<8x24xf32>
    %c0_i32 = arith.constant 0 : i32
    %5 = vector.broadcast %c0_i32 : i32 to vector<8x24xi32>
    %6 = arith.cmpi sge, %3, %5 : vector<8x24xi32>
    %c5_i32 = arith.constant 5 : i32
    %7 = vector.broadcast %c5_i32 : i32 to vector<8x24xi32>
    %8 = arith.cmpi slt, %3, %7 : vector<8x24xi32>
    %9 = arith.andi %6, %8 : vector<8x24xi1>
    %10 = vector.extract_strided_slice %2 {offsets = [0, 0], sizes = [8, 1], strides = [1, 1]} : vector<8x4xf32> to vector<8x1xf32>
    %c0_i32_1 = arith.constant 0 : i32
    %11 = vector.broadcast %c0_i32_1 : i32 to vector<8x24xi32>
    %12 = arith.subi %3, %11 : vector<8x24xi32>
    %13 = arith.sitofp %12 : vector<8x24xi32> to vector<8x24xf32>
    %14 = vector.broadcast %10 : vector<8x1xf32> to vector<8x24xf32>
    %15 = arith.cmpf oeq, %14, %13 : vector<8x24xf32>
    %16 = arith.andi %9, %15 : vector<8x24xi1>
    %cst_2 = arith.constant 1.000000e+00 : f32
    %cst_3 = arith.constant 0.000000e+00 : f32
    %17 = vector.broadcast %cst_2 : f32 to vector<8x24xf32>
    %18 = vector.broadcast %cst_3 : f32 to vector<8x24xf32>
    %19 = arith.select %16, %17, %18 : vector<8x24xi1>, vector<8x24xf32>
    %20 = arith.addf %4, %19 : vector<8x24xf32>
    %c5_i32_4 = arith.constant 5 : i32
    %21 = vector.broadcast %c5_i32_4 : i32 to vector<8x24xi32>
    %22 = arith.cmpi sge, %3, %21 : vector<8x24xi32>
    %c10_i32 = arith.constant 10 : i32
    %23 = vector.broadcast %c10_i32 : i32 to vector<8x24xi32>
    %24 = arith.cmpi slt, %3, %23 : vector<8x24xi32>
    %25 = arith.andi %22, %24 : vector<8x24xi1>
    %26 = vector.extract_strided_slice %2 {offsets = [0, 1], sizes = [8, 1], strides = [1, 1]} : vector<8x4xf32> to vector<8x1xf32>
    %c5_i32_5 = arith.constant 5 : i32
    %27 = vector.broadcast %c5_i32_5 : i32 to vector<8x24xi32>
    %28 = arith.subi %3, %27 : vector<8x24xi32>
    %29 = arith.sitofp %28 : vector<8x24xi32> to vector<8x24xf32>
    %30 = vector.broadcast %26 : vector<8x1xf32> to vector<8x24xf32>
    %31 = arith.cmpf oeq, %30, %29 : vector<8x24xf32>
    %32 = arith.andi %25, %31 : vector<8x24xi1>
    %cst_6 = arith.constant 1.000000e+00 : f32
    %cst_7 = arith.constant 0.000000e+00 : f32
    %33 = vector.broadcast %cst_6 : f32 to vector<8x24xf32>
    %34 = vector.broadcast %cst_7 : f32 to vector<8x24xf32>
    %35 = arith.select %32, %33, %34 : vector<8x24xi1>, vector<8x24xf32>
    %36 = arith.addf %20, %35 : vector<8x24xf32>
    %c10_i32_8 = arith.constant 10 : i32
    %37 = vector.broadcast %c10_i32_8 : i32 to vector<8x24xi32>
    %38 = arith.cmpi sge, %3, %37 : vector<8x24xi32>
    %c15_i32 = arith.constant 15 : i32
    %39 = vector.broadcast %c15_i32 : i32 to vector<8x24xi32>
    %40 = arith.cmpi slt, %3, %39 : vector<8x24xi32>
    %41 = arith.andi %38, %40 : vector<8x24xi1>
    %42 = vector.extract_strided_slice %2 {offsets = [0, 2], sizes = [8, 1], strides = [1, 1]} : vector<8x4xf32> to vector<8x1xf32>
    %c10_i32_9 = arith.constant 10 : i32
    %43 = vector.broadcast %c10_i32_9 : i32 to vector<8x24xi32>
    %44 = arith.subi %3, %43 : vector<8x24xi32>
    %45 = arith.sitofp %44 : vector<8x24xi32> to vector<8x24xf32>
    %46 = vector.broadcast %42 : vector<8x1xf32> to vector<8x24xf32>
    %47 = arith.cmpf oeq, %46, %45 : vector<8x24xf32>
    %48 = arith.andi %41, %47 : vector<8x24xi1>
    %cst_10 = arith.constant 1.000000e+00 : f32
    %cst_11 = arith.constant 0.000000e+00 : f32
    %49 = vector.broadcast %cst_10 : f32 to vector<8x24xf32>
    %50 = vector.broadcast %cst_11 : f32 to vector<8x24xf32>
    %51 = arith.select %48, %49, %50 : vector<8x24xi1>, vector<8x24xf32>
    %52 = arith.addf %36, %51 : vector<8x24xf32>
    %c15_i32_12 = arith.constant 15 : i32
    %53 = vector.broadcast %c15_i32_12 : i32 to vector<8x24xi32>
    %54 = arith.cmpi sge, %3, %53 : vector<8x24xi32>
    %c20_i32 = arith.constant 20 : i32
    %55 = vector.broadcast %c20_i32 : i32 to vector<8x24xi32>
    %56 = arith.cmpi slt, %3, %55 : vector<8x24xi32>
    %57 = arith.andi %54, %56 : vector<8x24xi1>
    %58 = vector.extract_strided_slice %2 {offsets = [0, 3], sizes = [8, 1], strides = [1, 1]} : vector<8x4xf32> to vector<8x1xf32>
    %c15_i32_13 = arith.constant 15 : i32
    %59 = vector.broadcast %c15_i32_13 : i32 to vector<8x24xi32>
    %60 = arith.subi %3, %59 : vector<8x24xi32>
    %61 = arith.sitofp %60 : vector<8x24xi32> to vector<8x24xf32>
    %62 = vector.broadcast %58 : vector<8x1xf32> to vector<8x24xf32>
    %63 = arith.cmpf oeq, %62, %61 : vector<8x24xf32>
    %64 = arith.andi %57, %63 : vector<8x24xi1>
    %cst_14 = arith.constant 1.000000e+00 : f32
    %cst_15 = arith.constant 0.000000e+00 : f32
    %65 = vector.broadcast %cst_14 : f32 to vector<8x24xf32>
    %66 = vector.broadcast %cst_15 : f32 to vector<8x24xf32>
    %67 = arith.select %64, %65, %66 : vector<8x24xi1>, vector<8x24xf32>
    %68 = arith.addf %52, %67 : vector<8x24xf32>
    %69 = tpu.concatenate %1, %68 in 1 : vector<8x16xf32>, vector<8x24xf32> -> vector<8x40xf32>
    %c0_16 = arith.constant 0 : index
    %c0_17 = arith.constant 0 : index
    %70 = vector.load %arg1[%c0_16, %c0_17] : memref<280x64xf32, #tpu.memory_space<vmem>>, vector<40x64xf32>
    %cst_18 = arith.constant dense<0.000000e+00> : vector<8x64xf32>
    %71 = tpu.matmul %69, %70, %cst_18 {dimension_numbers = #tpu.dot_dimension_numbers<[1], [0], [0], [1], [0, 0, 1, 1], [], []>} : vector<8x40xf32>, vector<40x64xf32>, vector<8x64xf32> -> vector<8x64xf32>
    %c240 = arith.constant 240 : index
    %c0_19 = arith.constant 0 : index
    %72 = vector.load %arg1[%c240, %c0_19] : memref<280x64xf32, #tpu.memory_space<vmem>>, vector<8x64xf32>
    %73 = arith.addf %71, %72 : vector<8x64xf32>
    %cst_20 = arith.constant 0.000000e+00 : f32
    %74 = vector.broadcast %cst_20 : f32 to vector<8x64xf32>
    %75 = arith.maximumf %73, %74 : vector<8x64xf32>
    %c40 = arith.constant 40 : index
    %c0_21 = arith.constant 0 : index
    %76 = vector.load %arg1[%c40, %c0_21] : memref<280x64xf32, #tpu.memory_space<vmem>>, vector<64x64xf32>
    %cst_22 = arith.constant dense<0.000000e+00> : vector<8x64xf32>
    %77 = tpu.matmul %75, %76, %cst_22 {dimension_numbers = #tpu.dot_dimension_numbers<[1], [0], [0], [1], [0, 0, 1, 1], [], []>} : vector<8x64xf32>, vector<64x64xf32>, vector<8x64xf32> -> vector<8x64xf32>
    %c248 = arith.constant 248 : index
    %c0_23 = arith.constant 0 : index
    %78 = vector.load %arg1[%c248, %c0_23] : memref<280x64xf32, #tpu.memory_space<vmem>>, vector<8x64xf32>
    %79 = arith.addf %77, %78 : vector<8x64xf32>
    %cst_24 = arith.constant 0.000000e+00 : f32
    %80 = vector.broadcast %cst_24 : f32 to vector<8x64xf32>
    %81 = arith.maximumf %79, %80 : vector<8x64xf32>
    %c104 = arith.constant 104 : index
    %c0_25 = arith.constant 0 : index
    %82 = vector.load %arg1[%c104, %c0_25] : memref<280x64xf32, #tpu.memory_space<vmem>>, vector<64x64xf32>
    %cst_26 = arith.constant dense<0.000000e+00> : vector<8x64xf32>
    %83 = tpu.matmul %81, %82, %cst_26 {dimension_numbers = #tpu.dot_dimension_numbers<[1], [0], [0], [1], [0, 0, 1, 1], [], []>} : vector<8x64xf32>, vector<64x64xf32>, vector<8x64xf32> -> vector<8x64xf32>
    %c256 = arith.constant 256 : index
    %c0_27 = arith.constant 0 : index
    %84 = vector.load %arg1[%c256, %c0_27] : memref<280x64xf32, #tpu.memory_space<vmem>>, vector<8x64xf32>
    %85 = arith.addf %83, %84 : vector<8x64xf32>
    %cst_28 = arith.constant 0.000000e+00 : f32
    %86 = vector.broadcast %cst_28 : f32 to vector<8x64xf32>
    %87 = arith.maximumf %85, %86 : vector<8x64xf32>
    %c168 = arith.constant 168 : index
    %c0_29 = arith.constant 0 : index
    %88 = vector.load %arg1[%c168, %c0_29] : memref<280x64xf32, #tpu.memory_space<vmem>>, vector<64x64xf32>
    %cst_30 = arith.constant dense<0.000000e+00> : vector<8x64xf32>
    %89 = tpu.matmul %87, %88, %cst_30 {dimension_numbers = #tpu.dot_dimension_numbers<[1], [0], [0], [1], [0, 0, 1, 1], [], []>} : vector<8x64xf32>, vector<64x64xf32>, vector<8x64xf32> -> vector<8x64xf32>
    %c264 = arith.constant 264 : index
    %c0_31 = arith.constant 0 : index
    %90 = vector.load %arg1[%c264, %c0_31] : memref<280x64xf32, #tpu.memory_space<vmem>>, vector<8x64xf32>
    %91 = arith.addf %89, %90 : vector<8x64xf32>
    %cst_32 = arith.constant 0.000000e+00 : f32
    %92 = vector.broadcast %cst_32 : f32 to vector<8x64xf32>
    %93 = arith.maximumf %91, %92 : vector<8x64xf32>
    %c232 = arith.constant 232 : index
    %c0_33 = arith.constant 0 : index
    %94 = vector.load %arg1[%c232, %c0_33] : memref<280x64xf32, #tpu.memory_space<vmem>>, vector<1x64xf32>
    %c272 = arith.constant 272 : index
    %c0_34 = arith.constant 0 : index
    %95 = vector.load %arg1[%c272, %c0_34] : memref<280x64xf32, #tpu.memory_space<vmem>>, vector<8x1xf32>
    %96 = vector.broadcast %94 : vector<1x64xf32> to vector<8x64xf32>
    %97 = arith.mulf %93, %96 : vector<8x64xf32>
    %cst_35 = arith.constant dense<0.000000e+00> : vector<8xf32>
    %98 = vector.multi_reduction <add>, %97, %cst_35 [1] : vector<8x64xf32> to vector<8xf32>
    %99 = vector.shape_cast %98 : vector<8xf32> to vector<8x1xf32>
    %100 = arith.addf %99, %95 : vector<8x1xf32>
    %c0_36 = arith.constant 0 : index
    %c0_37 = arith.constant 0 : index
    %101 = vector.load %arg2[%c0_36, %c0_37] : memref<8x1xf32, #tpu.memory_space<vmem>>, vector<8x1xf32>
    tpu.vector_store %arg2[%c0_36, %c0_37], %100 {strides = array<i32>} : memref<8x1xf32, #tpu.memory_space<vmem>>, vector<8x1xf32>,
    return
  }
}

</mosaic_0001>

<llo_original>
// kernel: forward.1
$region0: #{forward.1}
  #allocation0 [shape = 'u32[]', space=smem, size = 0x4, offset = 0x4, fixed_abs, tag = 'smem constant byte address 0x4 - core index']
  #allocation1 [shape = 'u32[144,128]{1,0:T(1,128)}', space=vmem, size = 0x12000, scoped, tag = 'internal scratch']
  %s0 = inlined_call_operand.vmem [shape: f32[8,20], index: 0, kind: input, shape index: {}]
  %s1 = inlined_call_operand.vmem [shape: f32[280,64], index: 1, kind: input, shape index: {}]
  %s2 = inlined_call_operand.vmem [shape: f32[8,1], index: 2, kind: output, shape index: {}]
  %s3 = sld [smem:[#allocation0]]
  $region18: #{forward.1} parent=0
    _
  %s5 = ssub.s32 1, %s3
  %s6 = scalar_select 0, %s5, %s3
  // Predicated region
  $region2: #{forward.1} parent=0 // pred_check
    _
  $region3: #{forward.1} parent=0 // pred_check_branch
    %8 = sbr.rel (0) target = $region5
  $region4: #{forward.1} parent=0 // pred_region
    _
  $region5: #{forward.1} parent=0 // pred_fallthru
    _
  // Predicated region
  $region6: #{forward.1} parent=0 // pred_check
    _
  $region7: #{forward.1} parent=0 // pred_check_branch
    %10 = sbr.rel (0) target = $region9
  $region8: #{forward.1} parent=0 // pred_region
    _
  $region9: #{forward.1} parent=0 // pred_fallthru
    _
  %v11 = vld [vmem:[%s0] sm:$0xff]
  %v12 = vlaneseq
  %v13 = vand.u32 %v12, 127
  %vm14 = vcmp.ge.s32.totalorder %v13, 0
  %vm15 = vcmp.lt.s32.totalorder %v13, 5
  %vm16 = vmand %vm14, %vm15
  %v17 = vcvt.s32.f32 %v13
  %19 = vset.pattern.permute.xlu0 16
  %20 = vperm.xlu0 %19, %v11
  %v21 = vpop.permute.xlu0 %20
  %vm23 = vcmp.eq.f32.partialorder %v21, %v17
  %vm24 = vmand %vm16, %vm23
  %v25 = vsel %vm24, 1.0, 0.0
  %v26 = vadd.f32 %v25, 0.0
  %vm27 = vcmp.ge.s32.totalorder %v13, 5
  %vm28 = vcmp.lt.s32.totalorder %v13, 10
  %vm29 = vmand %vm27, %vm28
  %v30 = vsub.s32 %v13, 5
  %v31 = vcvt.s32.f32 %v30
  %32 = vset.pattern.permute.xlu0 17
  %33 = vperm.xlu0 %32, %v11
  %v34 = vpop.permute.xlu0 %33
  %vm36 = vcmp.eq.f32.partialorder %v34, %v31
  %vm37 = vmand %vm29, %vm36
  %v38 = vsel %vm37, 1.0, 0.0
  %v39 = vadd.f32 %v26, %v38
  %vm40 = vcmp.ge.s32.totalorder %v13, 10
  %vm41 = vcmp.lt.s32.totalorder %v13, 15
  %vm42 = vmand %vm40, %vm41
  %v43 = vsub.s32 %v13, 10
  %v44 = vcvt.s32.f32 %v43
  %45 = vset.pattern.permute.xlu0 18
  %46 = vperm.xlu0 %45, %v11
  %v47 = vpop.permute.xlu0 %46
  %vm49 = vcmp.eq.f32.partialorder %v47, %v44
  %vm50 = vmand %vm42, %vm49
  %v51 = vsel %vm50, 1.0, 0.0
  %v52 = vadd.f32 %v39, %v51
  %vm53 = vcmp.ge.s32.totalorder %v13, 15
  %vm54 = vcmp.lt.s32.totalorder %v13, 20
  %vm55 = vmand %vm53, %vm54
  %v56 = vsub.s32 %v13, 15
  %v57 = vcvt.s32.f32 %v56
  %58 = vset.pattern.permute.xlu0 19
  %59 = vperm.xlu0 %58, %v11
  %v60 = vpop.permute.xlu0 %59
  %vm62 = vcmp.eq.f32.partialorder %v60, %v57
  %vm63 = vmand %vm55, %vm62
  %v64 = vsel %vm63, 1.0, 0.0
  %v65 = vadd.f32 %v52, %v64
  %67 = vrot.lane.b32.xlu0 %v65, 16
  %v68 = vpop.permute.xlu0 %67
  %vm70 = vcmask 130048
  %v71 = vsel %vm70, %v11, %v68
  %v72 = vld [vmem:[%s1] sm:$0xff]
  %v73 = vld [vmem:[%s1 + $0x8] sm:$0xff]
  %v74 = vld [vmem:[%s1 + $0x10] sm:$0xff]
  %v75 = vld [vmem:[%s1 + $0x18] sm:$0xff]
  %v76 = vld [vmem:[%s1 + $0x20] sm:$0xff]
  %v77 = vld [vmem:[%s1 + $0xf0] sm:$0xff]
  %vm78 = vcmask 326656
  %v80 = vsel %vm78, %v71, 0
  %82 = vmatprep.subr.mxu0 0.0
  %83 = vmatpush1.msra.mxu0 0.0
  %84 = vmatprep.subr.mxu0 0.0
  %85 = vmatpush1.msra.mxu0 0.0
  %86 = vmatprep.subr.mxu0 0.0
  %87 = vmatpush1.msra.mxu0 0.0
  %88 = vmatprep.subr.mxu0 0.0
  %89 = vmatpush1.msra.mxu0 0.0
  %90 = vmatprep.subr.mxu0 0.0
  %91 = vmatpush1.msra.mxu0 0.0
  %92 = vmatprep.subr.mxu0 0.0
  %93 = vmatpush1.msra.mxu0 0.0
  %94 = vmatprep.subr.mxu0 0.0
  %95 = vmatpush1.msra.mxu0 0.0
  %96 = vmatprep.subr.mxu0 0.0
  %97 = vmatpush1.msra.mxu0 0.0
  %98 = vmatprep.subr.mxu0 0.0
  %99 = vmatpush1.msra.mxu0 0.0
  %100 = vmatprep.subr.mxu0 0.0
  %101 = vmatpush1.msra.mxu0 0.0
  %102 = vmatprep.subr.mxu0 0.0
  %103 = vmatpush1.msra.mxu0 0.0
  %104 = vmatprep.subr.mxu0 0.0
  %105 = vmatpush1.msra.mxu0 %v76
  %106 = vmatprep.subr.mxu0 0.0
  %107 = vmatpush1.msra.mxu0 %v75
  %108 = vmatprep.subr.mxu0 0.0
  %109 = vmatpush1.msra.mxu0 %v74
  %110 = vmatprep.subr.mxu0 0.0
  %111 = vmatpush1.msra.mxu0 %v73
  %112 = vmatprep.subr.mxu0 0.0
  %113 = vmatpush1.msra.mxu0 %v72
  %114 = vmatprep.subr.mxu0 0.0
  %115 = vmatpush2.msra.mxu0 0.0
  %116 = vmatprep.subr.mxu0 0.0
  %117 = vmatpush2.msra.mxu0 0.0
  %118 = vmatprep.subr.mxu0 0.0
  %119 = vmatpush2.msra.mxu0 0.0
  %120 = vmatprep.subr.mxu0 0.0
  %121 = vmatpush2.msra.mxu0 0.0
  %122 = vmatprep.subr.mxu0 0.0
  %123 = vmatpush2.msra.mxu0 0.0
  %124 = vmatprep.subr.mxu0 0.0
  %125 = vmatpush2.msra.mxu0 0.0
  %126 = vmatprep.subr.mxu0 0.0
  %127 = vmatpush2.msra.mxu0 0.0
  %128 = vmatprep.subr.mxu0 0.0
  %129 = vmatpush2.msra.mxu0 0.0
  %130 = vmatprep.subr.mxu0 0.0
  %131 = vmatpush2.msra.mxu0 0.0
  %132 = vmatprep.subr.mxu0 0.0
  %133 = vmatpush2.msra.mxu0 0.0
  %134 = vmatprep.subr.mxu0 0.0
  %135 = vmatpush2.msra.mxu0 0.0
  %136 = vmatprep.subr.mxu0 0.0
  %137 = vmatpush2.msra.mxu0 0.0
  %138 = vmatprep.subr.mxu0 0.0
  %139 = vmatpush2.msra.mxu0 0.0
  %140 = vmatprep.subr.mxu0 0.0
  %141 = vmatpush2.msra.mxu0 0.0
  %142 = vmatprep.subr.mxu0 0.0
  %143 = vmatpush2.msra.mxu0 0.0
  %144 = vmatprep.subr.mxu0 0.0
  %145 = vmatpush2.msra.mxu0 0.0
  %146 = vmatprep.mubr.f32.mxu0 0.0
  %147 = vmatmul.mubr.f32.gmra.mxu0 %v80
  %v148 = vpop.f32.mrf.mxu0
  %v149 = vadd.f32 %v77, %v148
  %v150 = vpop.f32.mrf.mxu0
  %151 = vdwg.mxu0
  %v152 = vmax.f32 %v149, 0.0
  %v153 = vld [vmem:[%s1 + $0x28] sm:$0xff]
  %v154 = vld [vmem:[%s1 + $0x30] sm:$0xff]
  %v155 = vld [vmem:[%s1 + $0x38] sm:$0xff]
  %v156 = vld [vmem:[%s1 + $0x40] sm:$0xff]
  %v157 = vld [vmem:[%s1 + $0x48] sm:$0xff]
  %v158 = vld [vmem:[%s1 + $0x50] sm:$0xff]
  %v159 = vld [vmem:[%s1 + $0x58] sm:$0xff]
  %v160 = vld [vmem:[%s1 + $0x60] sm:$0xff]
  %v161 = vld [vmem:[%s1 + $0xf8] sm:$0xff]
  %vm162 = vcmask 523264
  %v164 = vsel %vm162, %v152, 0
  %166 = vmatprep.subr.mxu0 0.0
  %167 = vmatpush1.msra.mxu0 0.0
  %168 = vmatprep.subr.mxu0 0.0
  %169 = vmatpush1.msra.mxu0 0.0
  %170 = vmatprep.subr.mxu0 0.0
  %171 = vmatpush1.msra.mxu0 0.0
  %172 = vmatprep.subr.mxu0 0.0
  %173 = vmatpush1.msra.mxu0 0.0
  %174 = vmatprep.subr.mxu0 0.0
  %175 = vmatpush1.msra.mxu0 0.0
  %176 = vmatprep.subr.mxu0 0.0
  %177 = vmatpush1.msra.mxu0 0.0
  %178 = vmatprep.subr.mxu0 0.0
  %179 = vmatpush1.msra.mxu0 0.0
  %180 = vmatprep.subr.mxu0 0.0
  %181 = vmatpush1.msra.mxu0 0.0
  %182 = vmatprep.subr.mxu0 0.0
  %183 = vmatpush1.msra.mxu0 %v160
  %184 = vmatprep.subr.mxu0 0.0
  %185 = vmatpush1.msra.mxu0 %v159
  %186 = vmatprep.subr.mxu0 0.0
  %187 = vmatpush1.msra.mxu0 %v158
  %188 = vmatprep.subr.mxu0 0.0
  %189 = vmatpush1.msra.mxu0 %v157
  %190 = vmatprep.subr.mxu0 0.0
  %191 = vmatpush1.msra.mxu0 %v156
  %192 = vmatprep.subr.mxu0 0.0
  %193 = vmatpush1.msra.mxu0 %v155
  %194 = vmatprep.subr.mxu0 0.0
  %195 = vmatpush1.msra.mxu0 %v154
  %196 = vmatprep.subr.mxu0 0.0
  %197 = vmatpush1.msra.mxu0 %v153
  %198 = vmatprep.subr.mxu0 0.0
  %199 = vmatpush2.msra.mxu0 0.0
  %200 = vmatprep.subr.mxu0 0.0
  %201 = vmatpush2.msra.mxu0 0.0
  %202 = vmatprep.subr.mxu0 0.0
  %203 = vmatpush2.msra.mxu0 0.0
  %204 = vmatprep.subr.mxu0 0.0
  %205 = vmatpush2.msra.mxu0 0.0
  %206 = vmatprep.subr.mxu0 0.0
  %207 = vmatpush2.msra.mxu0 0.0
  %208 = vmatprep.subr.mxu0 0.0
  %209 = vmatpush2.msra.mxu0 0.0
  %210 = vmatprep.subr.mxu0 0.0
  %211 = vmatpush2.msra.mxu0 0.0
  %212 = vmatprep.subr.mxu0 0.0
  %213 = vmatpush2.msra.mxu0 0.0
  %214 = vmatprep.subr.mxu0 0.0
  %215 = vmatpush2.msra.mxu0 0.0
  %216 = vmatprep.subr.mxu0 0.0
  %217 = vmatpush2.msra.mxu0 0.0
  %218 = vmatprep.subr.mxu0 0.0
  %219 = vmatpush2.msra.mxu0 0.0
  %220 = vmatprep.subr.mxu0 0.0
  %221 = vmatpush2.msra.mxu0 0.0
  %222 = vmatprep.subr.mxu0 0.0
  %223 = vmatpush2.msra.mxu0 0.0
  %224 = vmatprep.subr.mxu0 0.0
  %225 = vmatpush2.msra.mxu0 0.0
  %226 = vmatprep.subr.mxu0 0.0
  %227 = vmatpush2.msra.mxu0 0.0
  %228 = vmatprep.subr.mxu0 0.0
  %229 = vmatpush2.msra.mxu0 0.0
  %230 = vmatprep.mubr.f32.mxu0 0.0
  %231 = vmatmul.mubr.f32.gmra.mxu0 %v164
  %v232 = vpop.f32.mrf.mxu0
  %v233 = vadd.f32 %v161, %v232
  %v234 = vpop.f32.mrf.mxu0
  %235 = vdwg.mxu0
  %v236 = vmax.f32 %v233, 0.0
  %v237 = vld [vmem:[%s1 + $0x68] sm:$0xff]
  %v238 = vld [vmem:[%s1 + $0x70] sm:$0xff]
  %v239 = vld [vmem:[%s1 + $0x78] sm:$0xff]
  %v240 = vld [vmem:[%s1 + $0x80] sm:$0xff]
  %v241 = vld [vmem:[%s1 + $0x88] sm:$0xff]
  %v242 = vld [vmem:[%s1 + $0x90] sm:$0xff]
  %v243 = vld [vmem:[%s1 + $0x98] sm:$0xff]
  %v244 = vld [vmem:[%s1 + $0xa0] sm:$0xff]
  %v245 = vld [vmem:[%s1 + $0x100] sm:$0xff]
  %v247 = vsel %vm162, %v236, 0
  %249 = vmatprep.subr.mxu0 0.0
  %250 = vmatpush1.msra.mxu0 0.0
  %251 = vmatprep.subr.mxu0 0.0
  %252 = vmatpush1.msra.mxu0 0.0
  %253 = vmatprep.subr.mxu0 0.0
  %254 = vmatpush1.msra.mxu0 0.0
  %255 = vmatprep.subr.mxu0 0.0
  %256 = vmatpush1.msra.mxu0 0.0
  %257 = vmatprep.subr.mxu0 0.0
  %258 = vmatpush1.msra.mxu0 0.0
  %259 = vmatprep.subr.mxu0 0.0
  %260 = vmatpush1.msra.mxu0 0.0
  %261 = vmatprep.subr.mxu0 0.0
  %262 = vmatpush1.msra.mxu0 0.0
  %263 = vmatprep.subr.mxu0 0.0
  %264 = vmatpush1.msra.mxu0 0.0
  %265 = vmatprep.subr.mxu0 0.0
  %266 = vmatpush1.msra.mxu0 %v244
  %267 = vmatprep.subr.mxu0 0.0
  %268 = vmatpush1.msra.mxu0 %v243
  %269 = vmatprep.subr.mxu0 0.0
  %270 = vmatpush1.msra.mxu0 %v242
  %271 = vmatprep.subr.mxu0 0.0
  %272 = vmatpush1.msra.mxu0 %v241
  %273 = vmatprep.subr.mxu0 0.0
  %274 = vmatpush1.msra.mxu0 %v240
  %275 = vmatprep.subr.mxu0 0.0
  %276 = vmatpush1.msra.mxu0 %v239
  %277 = vmatprep.subr.mxu0 0.0
  %278 = vmatpush1.msra.mxu0 %v238
  %279 = vmatprep.subr.mxu0 0.0
  %280 = vmatpush1.msra.mxu0 %v237
  %281 = vmatprep.subr.mxu0 0.0
  %282 = vmatpush2.msra.mxu0 0.0
  %283 = vmatprep.subr.mxu0 0.0
  %284 = vmatpush2.msra.mxu0 0.0
  %285 = vmatprep.subr.mxu0 0.0
  %286 = vmatpush2.msra.mxu0 0.0
  %287 = vmatprep.subr.mxu0 0.0
  %288 = vmatpush2.msra.mxu0 0.0
  %289 = vmatprep.subr.mxu0 0.0
  %290 = vmatpush2.msra.mxu0 0.0
  %291 = vmatprep.subr.mxu0 0.0
  %292 = vmatpush2.msra.mxu0 0.0
  %293 = vmatprep.subr.mxu0 0.0
  %294 = vmatpush2.msra.mxu0 0.0
  %295 = vmatprep.subr.mxu0 0.0
  %296 = vmatpush2.msra.mxu0 0.0
  %297 = vmatprep.subr.mxu0 0.0
  %298 = vmatpush2.msra.mxu0 0.0
  %299 = vmatprep.subr.mxu0 0.0
  %300 = vmatpush2.msra.mxu0 0.0
  %301 = vmatprep.subr.mxu0 0.0
  %302 = vmatpush2.msra.mxu0 0.0
  %303 = vmatprep.subr.mxu0 0.0
  %304 = vmatpush2.msra.mxu0 0.0
  %305 = vmatprep.subr.mxu0 0.0
  %306 = vmatpush2.msra.mxu0 0.0
  %307 = vmatprep.subr.mxu0 0.0
  %308 = vmatpush2.msra.mxu0 0.0
  %309 = vmatprep.subr.mxu0 0.0
  %310 = vmatpush2.msra.mxu0 0.0
  %311 = vmatprep.subr.mxu0 0.0
  %312 = vmatpush2.msra.mxu0 0.0
  %313 = vmatprep.mubr.f32.mxu0 0.0
  %314 = vmatmul.mubr.f32.gmra.mxu0 %v247
  %v315 = vpop.f32.mrf.mxu0
  %v316 = vadd.f32 %v245, %v315
  %v317 = vpop.f32.mrf.mxu0
  %318 = vdwg.mxu0
  %v319 = vmax.f32 %v316, 0.0
  %v320 = vld [vmem:[%s1 + $0xa8] sm:$0xff]
  %v321 = vld [vmem:[%s1 + $0xb0] sm:$0xff]
  %v322 = vld [vmem:[%s1 + $0xb8] sm:$0xff]
  %v323 = vld [vmem:[%s1 + $0xc0] sm:$0xff]
  %v324 = vld [vmem:[%s1 + $0xc8] sm:$0xff]
  %v325 = vld [vmem:[%s1 + $0xd0] sm:$0xff]
  %v326 = vld [vmem:[%s1 + $0xd8] sm:$0xff]
  %v327 = vld [vmem:[%s1 + $0xe0] sm:$0xff]
  %v328 = vld [vmem:[%s1 + $0x108] sm:$0xff]
  %v330 = vsel %vm162, %v319, 0
  %332 = vmatprep.subr.mxu0 0.0
  %333 = vmatpush1.msra.mxu0 0.0
  %334 = vmatprep.subr.mxu0 0.0
  %335 = vmatpush1.msra.mxu0 0.0
  %336 = vmatprep.subr.mxu0 0.0
  %337 = vmatpush1.msra.mxu0 0.0
  %338 = vmatprep.subr.mxu0 0.0
  %339 = vmatpush1.msra.mxu0 0.0
  %340 = vmatprep.subr.mxu0 0.0
  %341 = vmatpush1.msra.mxu0 0.0
  %342 = vmatprep.subr.mxu0 0.0
  %343 = vmatpush1.msra.mxu0 0.0
  %344 = vmatprep.subr.mxu0 0.0
  %345 = vmatpush1.msra.mxu0 0.0
  %346 = vmatprep.subr.mxu0 0.0
  %347 = vmatpush1.msra.mxu0 0.0
  %348 = vmatprep.subr.mxu0 0.0
  %349 = vmatpush1.msra.mxu0 %v327
  %350 = vmatprep.subr.mxu0 0.0
  %351 = vmatpush1.msra.mxu0 %v326
  %352 = vmatprep.subr.mxu0 0.0
  %353 = vmatpush1.msra.mxu0 %v325
  %354 = vmatprep.subr.mxu0 0.0
  %355 = vmatpush1.msra.mxu0 %v324
  %356 = vmatprep.subr.mxu0 0.0
  %357 = vmatpush1.msra.mxu0 %v323
  %358 = vmatprep.subr.mxu0 0.0
  %359 = vmatpush1.msra.mxu0 %v322
  %360 = vmatprep.subr.mxu0 0.0
  %361 = vmatpush1.msra.mxu0 %v321
  %362 = vmatprep.subr.mxu0 0.0
  %363 = vmatpush1.msra.mxu0 %v320
  %364 = vmatprep.subr.mxu0 0.0
  %365 = vmatpush2.msra.mxu0 0.0
  %366 = vmatprep.subr.mxu0 0.0
  %367 = vmatpush2.msra.mxu0 0.0
  %368 = vmatprep.subr.mxu0 0.0
  %369 = vmatpush2.msra.mxu0 0.0
  %370 = vmatprep.subr.mxu0 0.0
  %371 = vmatpush2.msra.mxu0 0.0
  %372 = vmatprep.subr.mxu0 0.0
  %373 = vmatpush2.msra.mxu0 0.0
  %374 = vmatprep.subr.mxu0 0.0
  %375 = vmatpush2.msra.mxu0 0.0
  %376 = vmatprep.subr.mxu0 0.0
  %377 = vmatpush2.msra.mxu0 0.0
  %378 = vmatprep.subr.mxu0 0.0
  %379 = vmatpush2.msra.mxu0 0.0
  %380 = vmatprep.subr.mxu0 0.0
  %381 = vmatpush2.msra.mxu0 0.0
  %382 = vmatprep.subr.mxu0 0.0
  %383 = vmatpush2.msra.mxu0 0.0
  %384 = vmatprep.subr.mxu0 0.0
  %385 = vmatpush2.msra.mxu0 0.0
  %386 = vmatprep.subr.mxu0 0.0
  %387 = vmatpush2.msra.mxu0 0.0
  %388 = vmatprep.subr.mxu0 0.0
  %389 = vmatpush2.msra.mxu0 0.0
  %390 = vmatprep.subr.mxu0 0.0
  %391 = vmatpush2.msra.mxu0 0.0
  %392 = vmatprep.subr.mxu0 0.0
  %393 = vmatpush2.msra.mxu0 0.0
  %394 = vmatprep.subr.mxu0 0.0
  %395 = vmatpush2.msra.mxu0 0.0
  %396 = vmatprep.mubr.f32.mxu0 0.0
  %397 = vmatmul.mubr.f32.gmra.mxu0 %v330
  %v398 = vpop.f32.mrf.mxu0
  %v399 = vadd.f32 %v328, %v398
  %v400 = vpop.f32.mrf.mxu0
  %401 = vdwg.mxu0
  %v402 = vmax.f32 %v399, 0.0
  %v403 = vld [vmem:[%s1 + $0xe8] sm:$0x1]
  %v404 = vld [vmem:[%s1 + $0x110] sm:$0xff]
  %v405 = vlaneseq
  %v406 = vshrl.u32 %v405, 7
  %v407 = vsub.s32 0, %v406
  %v408 = vrot.slane %v403, %v407
  %v409 = vmul.f32 %v402, %v408
  %v410 = vsel %vm162, %v409, 0.0
  %411 = vadd.xlane.f32.xlu0 %v410
  %v412 = vpop.xlane.xlu0 %411
  %v413 = vadd.f32 %v412, %v404
  %vm414 = vcmask 7168
  %415 = vst.msk [vmem:[%s2] sm:$0xff] %vm414, %v413
  // Predicated region
  $region10: #{forward.1} parent=0 // pred_check
    _
  $region11: #{forward.1} parent=0 // pred_check_branch
    %417 = sbr.rel (0) target = $region13
  $region12: #{forward.1} parent=0 // pred_region
    _
  $region13: #{forward.1} parent=0 // pred_fallthru
    _
  // Predicated region
  $region14: #{forward.1} parent=0 // pred_check
    _
  $region15: #{forward.1} parent=0 // pred_check_branch
    %419 = sbr.rel (0) target = $region17
  $region16: #{forward.1} parent=0 // pred_region
    _
  $region17: #{forward.1} parent=0 // pred_fallthru
    _

</llo_original>
